<compile_context>
chip_gen: v7x
topology: tpu7x:2x2x1
jax: 0.10.0
libtpu: 0.0.40
codegen_flags: <defaults>
</compile_context>

<pallas_src>
import jax
import jax.numpy as jnp
from jax.experimental import pallas as pl
from jax.experimental.pallas import tpu as pltpu


# ----------------------------------------------------------------------------
# Pallas kernel: HBM -> HBM copy via the DMA engine (no VMEM bounce).
# Used only when a materialized copy of the identity output is required.
# ----------------------------------------------------------------------------
def _dma_identity_copy_kernel(x_ref, o_ref, copy_sem):
    cp = pltpu.make_async_copy(x_ref, o_ref, copy_sem)
    cp.start()
    cp.wait()


@jax.jit
def dummy_body_copy_pallas(x):
    """Materialized identity copy: single DMA, operands left in place (pl.ANY)."""
    return pl.pallas_call(
        _dma_identity_copy_kernel,
        out_shape=jax.ShapeDtypeStruct(x.shape, x.dtype),
        in_specs=[pl.BlockSpec(memory_space=pl.ANY)],
        out_specs=pl.BlockSpec(memory_space=pl.ANY),
        scratch_shapes=[pltpu.SemaphoreType.DMA],
    )(x)


# ----------------------------------------------------------------------------
# DummyBody wrapper (mirrors the PyTorch module's interface).
# ----------------------------------------------------------------------------
class DummyBodyPallas:
    def __init__(self, state_dim):
        self.feature_dim = state_dim

    def __call__(self, x):
        # Identity forward: zero-cost path (no kernel, no copy, no dispatch).
        return x


if __name__ == "__main__":
    key = jax.random.PRNGKey(0)
    # Small shape consistent with the module: batch=2, state_dim=32.
    state_dim = 32
    x = jax.random.normal(key, (2, state_dim), jnp.float32)

    body = DummyBodyPallas(state_dim)

    # Default (fastest) forward path: pure identity.
    out_fast = body(x)
    assert out_fast.shape == x.shape
    assert out_fast.dtype == x.dtype
    assert body.feature_dim == state_dim
    assert jnp.array_equal(out_fast, x)

    # Pallas kernel path (materialized out-of-place copy via DMA).
    out_copy = jax.block_until_ready(dummy_body_copy_pallas(x))
    assert out_copy.shape == x.shape, out_copy.shape
    assert out_copy.dtype == x.dtype, out_copy.dtype
    assert jnp.array_equal(out_copy, x), float(jnp.max(jnp.abs(out_copy - x)))

    print("KERNEL_OK")
</pallas_src>

<mosaic_0001>
module attributes {stable_mosaic.version = 11 : i64} {
  func.func @_dma_identity_copy_kernel(%arg0: memref<2x32xf32, #tpu.memory_space<any>>, %arg1: memref<2x32xf32, #tpu.memory_space<any>>, %arg2: memref<!tpu.dma_semaphore, #tpu.memory_space<semaphore_mem>>) attributes {dimension_semantics = [], scalar_prefetch = 0 : i64, scratch_operands = 1 : i64, tpu.core_type = #tpu.core_type<tc>} {
    tpu.enqueue_dma source(%arg0 : memref<2x32xf32, #tpu.memory_space<any>>) target(%arg1 : memref<2x32xf32, #tpu.memory_space<any>>) target_semaphore(%arg2 : memref<!tpu.dma_semaphore, #tpu.memory_space<semaphore_mem>>)
    tpu.wait_dma2 semaphore(%arg2 : memref<!tpu.dma_semaphore, #tpu.memory_space<semaphore_mem>>) src(%arg0 : memref<2x32xf32, #tpu.memory_space<any>>) dst(%arg1 : memref<2x32xf32, #tpu.memory_space<any>>)
    return
  }
}

</mosaic_0001>

<llo_original>
// kernel: dummy_body_copy_pallas.1
$region0: #{dummy_body_copy_pallas.1}
  #allocation0 [shape = 'u32[]', space=smem, size = 0x4, offset = 0x4, fixed_abs, tag = 'smem constant byte address 0x4 - core index']
  #allocation1 [shape = 'u32[144,128]{1,0:T(1,128)}', space=vmem, size = 0x12000, scoped, tag = 'internal scratch']
  #allocation2 [shape = 's32[1]{0}', space=sflag, size = 0x4, scoped, tag = 'scratch operand']
  #allocation3 [shape = 's32[]', space=sflag, size = 0x4, offset = 0, fixed_abs, tag = 'sflag constant byte address 0x0 - dummy sync flag']
  #allocation4 [shape = 'u32[0]{0}', space=smem, size = 0, offset = 0, fixed_abs, tag = 'smem constant byte address 0x0 - null']
  %s0 = inlined_call_operand.hbm [shape: f32[2,32], index: 0, kind: input, shape index: {}]
  %s1 = inlined_call_operand.hbm [shape: f32[2,32], index: 1, kind: output, shape index: {}]
  %s2 = sld [smem:[#allocation0]]
  $region2: #{dummy_body_copy_pallas.1} parent=0
    _
  %s4 = ssub.s32 1, %s2
  %s5 = scalar_select 0, %s4, %s2
  %s7 = sshll.u32 1, 14
  %s8 = sxor.u32 4294967295, %s7
  %s11 = sshll.u32 3, 24
  %s12 = sxor.u32 4294967295, %s11
  %s13 = sand.u32 0, %s12
  %s15 = sor.u32 %s13, 0
  %18 = dma.general %s0, 32, %s1, [#allocation2], [#allocation3], [#allocation4], %s15, 0
  %s19 = smul.u32 2, 1
  %s20 = sshll.u32 %s19, 4
  %21 = dma.done [#allocation2], %s20
  %22 = vsyncmov [#allocation2]
  %s23 = vpop.sfrf %22
  %p24 = scmp.eq.s32.totalorder %s23, 0
  %p25 = pneg %p24
  %27 = shalt.err (%p25)

</llo_original>
